<compile_context>
chip_gen: v7x
topology: tpu7x:2x2x1
jax: 0.10.0
libtpu: 0.0.40
codegen_flags: <defaults>
</compile_context>

<pallas_src>
import functools

import jax
import jax.numpy as jnp
from jax.experimental import pallas as pl
from jax.experimental.pallas import tpu as pltpu

_VMEM_LIMIT = 48 * 1024 * 1024   # comfortably under v7x's 64 MiB physical VMEM


def _round_up(x, m):
    return ((x + m - 1) // m) * m


def _pick_tile(padded_dim, candidates):
    for t in candidates:
        if padded_dim % t == 0:
            return t
    return candidates[-1]


def _row_tiles(m, c):
    """Row-tile size for elementwise kernels: ~2 MiB f32 blocks, multiple of 8."""
    max_rows = max(8, min(512, ((2 * 1024 * 1024) // (4 * c)) // 8 * 8))
    if m <= max_rows:
        t = _round_up(m, 8)
        return t, t
    return max_rows, _round_up(m, max_rows)


# ----------------------------------------------------------------------------
# Tiled MXU matmul (bf16 operands, f32 accumulation, fused bias epilogue)
# ----------------------------------------------------------------------------
def _matmul_kernel(a_ref, b_ref, o_ref, acc_ref):
    @pl.when(pl.program_id(2) == 0)
    def _():
        acc_ref[...] = jnp.zeros_like(acc_ref)

    acc_ref[...] += jnp.dot(a_ref[...], b_ref[...],
                            preferred_element_type=jnp.float32)

    @pl.when(pl.program_id(2) == pl.num_programs(2) - 1)
    def _():
        o_ref[...] = acc_ref[...]


def _matmul_bias_kernel(a_ref, b_ref, bias_ref, o_ref, acc_ref):
    @pl.when(pl.program_id(2) == 0)
    def _():
        acc_ref[...] = jnp.zeros_like(acc_ref)

    acc_ref[...] += jnp.dot(a_ref[...], b_ref[...],
                            preferred_element_type=jnp.float32)

    @pl.when(pl.program_id(2) == pl.num_programs(2) - 1)
    def _():
        o_ref[...] = acc_ref[...] + bias_ref[...]


@jax.jit
def pallas_matmul(a, b, bias=None):
    """(M, K) @ (K, N) [+ bias] -> (M, N) f32."""
    m, k = a.shape
    k2, n = b.shape
    assert k == k2
    if m <= 256:
        tm = _round_up(m, 8)
        mp = tm
    else:
        tm = 256
        mp = _round_up(m, tm)
    kp = _round_up(k, 128)
    tk = _pick_tile(kp, (512, 384, 256, 128))
    np_ = _round_up(n, 128)
    tn = _pick_tile(np_, (256, 128))

    a_bf = a.astype(jnp.bfloat16)
    b_bf = b.astype(jnp.bfloat16)
    if (mp, kp) != (m, k):
        a_bf = jnp.pad(a_bf, ((0, mp - m), (0, kp - k)))
    if (kp, np_) != (k, n):
        b_bf = jnp.pad(b_bf, ((0, kp - k), (0, np_ - n)))

    in_specs = [pl.BlockSpec((tm, tk), lambda i, j, l: (i, l)),
                pl.BlockSpec((tk, tn), lambda i, j, l: (l, j))]
    args = [a_bf, b_bf]
    if bias is None:
        kernel = _matmul_kernel
    else:
        bias_p = jnp.pad(bias.astype(jnp.float32)[None, :], ((0, 0), (0, np_ - n)))
        in_specs.append(pl.BlockSpec((1, tn), lambda i, j, l: (0, j)))
        args.append(bias_p)
        kernel = _matmul_bias_kernel

    out = pl.pallas_call(
        kernel,
        out_shape=jax.ShapeDtypeStruct((mp, np_), jnp.float32),
        grid_spec=pltpu.PrefetchScalarGridSpec(
            num_scalar_prefetch=0,
            grid=(mp // tm, np_ // tn, kp // tk),
            in_specs=in_specs,
            out_specs=pl.BlockSpec((tm, tn), lambda i, j, l: (i, j)),
            scratch_shapes=[pltpu.VMEM((tm, tn), jnp.float32)],
        ),
        compiler_params=pltpu.CompilerParams(
            dimension_semantics=("parallel", "parallel", "arbitrary"),
            vmem_limit_bytes=_VMEM_LIMIT),
    )(*args)
    return out[:m, :n]


# ----------------------------------------------------------------------------
# BatchNorm: Pallas stats pass + fused affine(+residual)(+ReLU) pass
# ----------------------------------------------------------------------------
def _bn_stats_kernel(x_ref, sum_ref, sq_ref, s_acc, q_acc):
    @pl.when(pl.program_id(0) == 0)
    def _():
        s_acc[...] = jnp.zeros_like(s_acc)
        q_acc[...] = jnp.zeros_like(q_acc)

    x = x_ref[...]
    s_acc[...] += jnp.sum(x, axis=0, keepdims=True)
    q_acc[...] += jnp.sum(x * x, axis=0, keepdims=True)

    @pl.when(pl.program_id(0) == pl.num_programs(0) - 1)
    def _():
        sum_ref[...] = s_acc[...]
        sq_ref[...] = q_acc[...]


def _bn_stats(x2d):
    m, c = x2d.shape
    tr, mp = _row_tiles(m, c)
    xp = jnp.pad(x2d, ((0, mp - m), (0, 0))) if mp != m else x2d
    return pl.pallas_call(
        _bn_stats_kernel,
        out_shape=(jax.ShapeDtypeStruct((1, c), jnp.float32),
                   jax.ShapeDtypeStruct((1, c), jnp.float32)),
        grid_spec=pltpu.PrefetchScalarGridSpec(
            num_scalar_prefetch=0,
            grid=(mp // tr,),
            in_specs=[pl.BlockSpec((tr, c), lambda i: (i, 0))],
            out_specs=(pl.BlockSpec((1, c), lambda i: (0, 0)),
                       pl.BlockSpec((1, c), lambda i: (0, 0))),
            scratch_shapes=[pltpu.VMEM((1, c), jnp.float32),
                            pltpu.VMEM((1, c), jnp.float32)],
        ),
        compiler_params=pltpu.CompilerParams(
            dimension_semantics=("arbitrary",),
            vmem_limit_bytes=_VMEM_LIMIT),
    )(xp)


def _affine_kernel(x_ref, s_ref, t_ref, o_ref, *, relu):
    y = x_ref[...] * s_ref[...] + t_ref[...]
    if relu:
        y = jnp.maximum(y, 0.0)
    o_ref[...] = y


def _affine_res_kernel(x_ref, s_ref, t_ref, r_ref, o_ref, *, relu):
    y = x_ref[...] * s_ref[...] + t_ref[...] + r_ref[...]
    if relu:
        y = jnp.maximum(y, 0.0)
    o_ref[...] = y


def _affine(x2d, scale, shift, residual, relu):
    m, c = x2d.shape
    tr, mp = _row_tiles(m, c)
    pad = mp - m
    xp = jnp.pad(x2d, ((0, pad), (0, 0))) if pad else x2d
    args = [xp, scale, shift]
    in_specs = [pl.BlockSpec((tr, c), lambda i: (i, 0)),
                pl.BlockSpec((1, c), lambda i: (0, 0)),
                pl.BlockSpec((1, c), lambda i: (0, 0))]
    if residual is None:
        kernel = functools.partial(_affine_kernel, relu=relu)
    else:
        rp = jnp.pad(residual, ((0, pad), (0, 0))) if pad else residual
        args.append(rp)
        in_specs.append(pl.BlockSpec((tr, c), lambda i: (i, 0)))
        kernel = functools.partial(_affine_res_kernel, relu=relu)
    out = pl.pallas_call(
        kernel,
        out_shape=jax.ShapeDtypeStruct((mp, c), jnp.float32),
        grid_spec=pltpu.PrefetchScalarGridSpec(
            num_scalar_prefetch=0,
            grid=(mp // tr,),
            in_specs=in_specs,
            out_specs=pl.BlockSpec((tr, c), lambda i: (i, 0)),
        ),
        compiler_params=pltpu.CompilerParams(
            dimension_semantics=("parallel",),
            vmem_limit_bytes=_VMEM_LIMIT),
    )(*args)
    return out[:m]


@functools.partial(jax.jit, static_argnames=("relu",))
def _fused_bn(x2d, gamma, beta, residual, relu):
    m = x2d.shape[0]
    x2d = x2d.astype(jnp.float32)
    s, q = _bn_stats(x2d)
    mean = s / m
    var = q / m - mean * mean            # biased var == PyTorch training-mode norm
    scale = gamma[None, :] / jnp.sqrt(var + 1e-5)
    shift = beta[None, :] - mean * scale
    res = None if residual is None else residual.astype(jnp.float32)
    return _affine(x2d, scale, shift, res, relu)


def batchnorm_2d(x_nhwc, gamma, beta, residual=None, relu=False):
    b, h, w, c = x_nhwc.shape
    x2d = x_nhwc.reshape(b * h * w, c)
    r2d = None if residual is None else residual.reshape(b * h * w, c)
    return _fused_bn(x2d, gamma, beta, r2d, relu).reshape(b, h, w, c)


# ----------------------------------------------------------------------------
# NL block streaming kernel: y[b] = (ReLU(a_i + c_j) / HW) @ g_x[b]
# ----------------------------------------------------------------------------
def _nl_fgy_kernel(a_ref, c_ref, g_ref, o_ref, acc_ref, *, inv_n):
    @pl.when(pl.program_id(2) == 0)
    def _():
        acc_ref[...] = jnp.zeros_like(acc_ref)

    # f tile is built on the fly (never written to HBM): (1, ti, tk)
    f = jnp.maximum(a_ref[...] + c_ref[...], 0.0) * inv_n
    acc_ref[...] += jnp.einsum("bik,bkc->bic", f.astype(jnp.bfloat16), g_ref[...],
                               preferred_element_type=jnp.float32)

    @pl.when(pl.program_id(2) == pl.num_programs(2) - 1)
    def _():
        o_ref[...] = acc_ref[...]


@jax.jit
def nl_attention(a_rows, c_cols, g_x):
    """y[b] = (ReLU(a[b,:,None] + c[b,None,:]) / HW) @ g_x[b], streamed."""
    bsz, hw = a_rows.shape
    ci = g_x.shape[-1]
    t = 128
    hwp = _round_up(hw, t)
    cip = _round_up(ci, 128)
    av = jnp.pad(a_rows.astype(jnp.float32), ((0, 0), (0, hwp - hw)))[..., None]
    cv = jnp.pad(c_cols.astype(jnp.float32), ((0, 0), (0, hwp - hw)))[:, None, :]
    gv = jnp.pad(g_x.astype(jnp.bfloat16), ((0, 0), (0, hwp - hw), (0, cip - ci)))
    y = pl.pallas_call(
        functools.partial(_nl_fgy_kernel, inv_n=1.0 / hw),
        out_shape=jax.ShapeDtypeStruct((bsz, hwp, cip), jnp.float32),
        grid_spec=pltpu.PrefetchScalarGridSpec(
            num_scalar_prefetch=0,
            grid=(bsz, hwp // t, hwp // t),
            in_specs=[
                pl.BlockSpec((1, t, 1), lambda b, i, l: (b, i, 0)),
                pl.BlockSpec((1, 1, t), lambda b, i, l: (b, 0, l)),
                pl.BlockSpec((1, t, cip), lambda b, i, l: (b, l, 0)),
            ],
            out_specs=pl.BlockSpec((1, t, cip), lambda b, i, l: (b, i, 0)),
            scratch_shapes=[pltpu.VMEM((1, t, cip), jnp.float32)],
        ),
        compiler_params=pltpu.CompilerParams(
            dimension_semantics=("parallel", "parallel", "arbitrary"),
            vmem_limit_bytes=_VMEM_LIMIT),
    )(av, cv, gv)
    return y[:, :hw, :ci]


# ----------------------------------------------------------------------------
# Layer wrappers (glue in plain JAX, compute in Pallas)
# ----------------------------------------------------------------------------
def conv2d(x_nhwc, p, stride=1, padding=0, use_bias=True):
    """NHWC conv via im2col + Pallas bf16 MXU matmul; weight is matmul-ready."""
    b, h, w, cin = x_nhwc.shape
    kh, kw = p["kh"], p["kw"]
    cout = p["wm"].shape[1]
    xp = jnp.pad(x_nhwc, ((0, 0), (padding, padding), (padding, padding), (0, 0)))
    ho = (h + 2 * padding - kh) // stride + 1
    wo = (w + 2 * padding - kw) // stride + 1
    if kh == 1 and kw == 1:
        patches = xp[:, ::stride, ::stride, :].reshape(b * ho * wo, cin)
    else:
        # TODO(synk): fold the kh*kw taps into the matmul K grid axis instead of
        # materializing im2col patches (saves a kh*kw x HBM round trip).
        cols = [xp[:, i:i + stride * ho:stride, j:j + stride * wo:stride, :]
                for i in range(kh) for j in range(kw)]
        patches = jnp.concatenate(cols, axis=-1).reshape(b * ho * wo, kh * kw * cin)
    out = pallas_matmul(patches, p["wm"], bias=p["b"] if use_bias else None)
    return out.reshape(b, ho, wo, cout)


def maxpool_3x3_s2_p1(x_nhwc):
    b, h, w, c = x_nhwc.shape
    xp = jnp.pad(x_nhwc, ((0, 0), (1, 1), (1, 1), (0, 0)),
                 constant_values=-jnp.inf)
    ho = (h + 2 - 3) // 2 + 1
    wo = (w + 2 - 3) // 2 + 1
    out = jnp.full((b, ho, wo, c), -jnp.inf, dtype=x_nhwc.dtype)
    for i in range(3):
        for j in range(3):
            out = jnp.maximum(out, xp[:, i:i + 2 * ho:2, j:j + 2 * wo:2, :])
    return out


# ----------------------------------------------------------------------------
# Parameter initialization (PyTorch-default-like fan-in uniform)
# ----------------------------------------------------------------------------
def conv_params(key, cout, cin, kh, kw):
    k1, k2 = jax.random.split(key)
    bound = 1.0 / float(cin * kh * kw) ** 0.5
    w = jax.random.uniform(k1, (cout, cin, kh, kw), jnp.float32, -bound, bound)
    b = jax.random.uniform(k2, (cout,), jnp.float32, -bound, bound)
    wm = jnp.transpose(w, (2, 3, 1, 0)).reshape(kh * kw * cin, cout)
    return {"wm": wm.astype(jnp.bfloat16), "b": b, "kh": kh, "kw": kw}


def linear_params(key, out_f, in_f):
    k1, k2 = jax.random.split(key)
    bound = 1.0 / float(in_f) ** 0.5
    w = jax.random.uniform(k1, (out_f, in_f), jnp.float32, -bound, bound)
    b = jax.random.uniform(k2, (out_f,), jnp.float32, -bound, bound)
    return {"wm": jnp.transpose(w).astype(jnp.bfloat16), "b": b}


def bn_params(c, gamma=1.0, beta=0.0):
    return {"gamma": jnp.full((c,), gamma, jnp.float32),
            "beta": jnp.full((c,), beta, jnp.float32)}


def init_bottleneck(key, cin, cout, stride, downsample):
    ks = jax.random.split(key, 4)
    p = {
        "stride": stride,
        "conv1": conv_params(ks[0], cout, cin, 1, 1), "bn1": bn_params(cout),
        "conv2": conv_params(ks[1], cout, cout, 3, 3), "bn2": bn_params(cout),
        "conv3": conv_params(ks[2], cout * 4, cout, 1, 1), "bn3": bn_params(cout * 4),
    }
    if downsample:
        p["ds_conv"] = conv_params(ks[3], cout * 4, cin, 1, 1)
        p["ds_bn"] = bn_params(cout * 4)
    return p


def init_nlblock(key, in_ch, inter_ch):
    ks = jax.random.split(key, 5)

    def conv1x1(k, cout, cin):
        k1, k2 = jax.random.split(k)
        bound = 1.0 / float(cin) ** 0.5
        w = jax.random.uniform(k1, (cin, cout), jnp.float32, -bound, bound)
        b = jax.random.uniform(k2, (cout,), jnp.float32, -bound, bound)
        return w, b

    gm, g_b = conv1x1(ks[0], inter_ch, in_ch)
    thm, th_b = conv1x1(ks[1], inter_ch, in_ch)
    phm, ph_b = conv1x1(ks[2], inter_ch, in_ch)
    wf_w, wf_b = conv1x1(ks[3], 1, 2 * inter_ch)
    wz_wm, _ = conv1x1(ks[4], in_ch, inter_ch)   # W_z conv bias cancelled by its BN
    wf_th, wf_ph = wf_w[:inter_ch, 0], wf_w[inter_ch:, 0]
    # Exact algebraic fold of theta/phi + W_f:
    #   f[b,i,j] = ReLU(wf_th.theta_i + wf_ph.phi_j + b_f) = ReLU(a_i + c_j)
    #   a = x @ (thm @ wf_th) + th_b.wf_th + b_f ;  c = x @ (phm @ wf_ph) + ph_b.wf_ph
    a_col = thm @ wf_th
    c_col = phm @ wf_ph
    proj_w = jnp.concatenate([gm, a_col[:, None], c_col[:, None]], axis=1)
    proj_b = jnp.concatenate([g_b,
                              (jnp.dot(th_b, wf_th) + wf_b[0]).reshape(1),
                              jnp.dot(ph_b, wf_ph).reshape(1)])
    return {
        "inter": inter_ch,
        "proj_w": proj_w.astype(jnp.bfloat16),
        "proj_b": proj_b,
        "wz_wm": wz_wm.astype(jnp.bfloat16),
        "wz_bn": bn_params(in_ch, gamma=0.0, beta=0.0),   # nn.init.constant_(..., 0)
    }


def init_resnet(key, layers, num_classes, non_local):
    keys = iter(jax.random.split(key, 64))
    params = {"conv1": conv_params(next(keys), 64, 1, 7, 7), "bn1": bn_params(64)}
    state = {"in_ch": 64}

    def make_layer(num_blocks, out_ch, stride, nl):
        blocks = []
        downsample = (stride != 1) or (state["in_ch"] != out_ch * 4)
        blocks.append(("block", init_bottleneck(next(keys), state["in_ch"],
                                                out_ch, stride, downsample)))
        state["in_ch"] = out_ch * 4
        if not nl:
            for _ in range(num_blocks - 1):
                blocks.append(("block", init_bottleneck(next(keys), state["in_ch"],
                                                        out_ch, 1, False)))
        else:
            for _ in range(num_blocks - 3):
                blocks.append(("block", init_bottleneck(next(keys), state["in_ch"],
                                                        out_ch, 1, False)))
            blocks.append(("nl", init_nlblock(next(keys), state["in_ch"], out_ch)))
            blocks.append(("block", init_bottleneck(next(keys), state["in_ch"],
                                                    out_ch, 1, False)))
        return blocks

    params["layer1"] = make_layer(layers[0], 64, 1, False)
    params["layer2"] = make_layer(layers[1], 128, 2, non_local)
    params["layer3"] = make_layer(layers[2], 256, 1, non_local)
    params["layer4"] = make_layer(layers[3], 512, 2, False)
    params["fc"] = linear_params(next(keys), num_classes, 512 * 4)
    return params


# ----------------------------------------------------------------------------
# Forward passes
# ----------------------------------------------------------------------------
def bottleneck_forward(p, x):
    identity = x
    # conv biases dropped: a per-channel constant before training-mode BN is
    # exactly cancelled by the mean subtraction.
    out = conv2d(x, p["conv1"], use_bias=False)
    out = batchnorm_2d(out, p["bn1"]["gamma"], p["bn1"]["beta"], relu=True)
    out = conv2d(out, p["conv2"], stride=p["stride"], padding=1, use_bias=False)
    out = batchnorm_2d(out, p["bn2"]["gamma"], p["bn2"]["beta"], relu=True)
    out = conv2d(out, p["conv3"], use_bias=False)
    if "ds_conv" in p:
        identity = conv2d(x, p["ds_conv"], stride=p["stride"], use_bias=False)
        identity = batchnorm_2d(identity, p["ds_bn"]["gamma"], p["ds_bn"]["beta"])
    return batchnorm_2d(out, p["bn3"]["gamma"], p["bn3"]["beta"],
                        residual=identity, relu=True)


def nlblock_forward(p, x_nhwc):
    b, h, w, c = x_nhwc.shape
    ci = p["inter"]
    hw = h * w
    x2d = x_nhwc.reshape(b * hw, c)
    # One fused matmul producing [g_x | a | c] with bias in the epilogue.
    proj = pallas_matmul(x2d, p["proj_w"], bias=p["proj_b"])
    g_x = proj[:, :ci].reshape(b, hw, ci)
    a = proj[:, ci].reshape(b, hw)
    cc = proj[:, ci + 1].reshape(b, hw)
    y = nl_attention(a, cc, g_x)                                 # (B, HW, Ci)
    # W_z conv1x1 (bias cancelled by BN) + BN(gamma=0,beta=0) + residual add.
    wz = pallas_matmul(y.reshape(b * hw, ci), p["wz_wm"]).reshape(b, h, w, c)
    return batchnorm_2d(wz, p["wz_bn"]["gamma"], p["wz_bn"]["beta"],
                        residual=x_nhwc)


def resnet_forward(params, x_nchw):
    x = jnp.transpose(x_nchw, (0, 2, 3, 1)).astype(jnp.float32)   # NCHW -> NHWC
    x = conv2d(x, params["conv1"], stride=2, padding=3, use_bias=False)
    x = batchnorm_2d(x, params["bn1"]["gamma"], params["bn1"]["beta"], relu=True)
    x = maxpool_3x3_s2_p1(x)
    for name in ("layer1", "layer2", "layer3", "layer4"):
        for kind, bp in params[name]:
            x = bottleneck_forward(bp, x) if kind == "block" else nlblock_forward(bp, x)
    feat = jnp.mean(x, axis=(1, 2))                               # AdaptiveAvgPool2d((1,1))
    return pallas_matmul(feat, params["fc"]["wm"], bias=params["fc"]["b"])


# ----------------------------------------------------------------------------
if __name__ == "__main__":
    key = jax.random.PRNGKey(0)
    pkey, xkey = jax.random.split(key)

    # Small synthetic config: ResNet(block=Bottleneck, layers=[1,3,3,1],
    # num_classes=10, non_local=True); input is NCHW with 1 channel (conv1 expects 1).
    params = init_resnet(pkey, layers=[1, 3, 3, 1], num_classes=10, non_local=True)
    x = jax.random.normal(xkey, (2, 1, 32, 32), jnp.float32)

    out = resnet_forward(params, x)
    out = jax.block_until_ready(out)
    assert out.shape == (2, 10), out.shape
    assert bool(jnp.all(jnp.isfinite(out)))
    print("KERNEL_OK")
</pallas_src>

<mosaic_0001>
module attributes {stable_mosaic.version = 11 : i64} {
  func.func @_matmul_kernel(%arg0: i32, %arg1: i32, %arg2: i32, %arg3: memref<256x128xbf16, #tpu.memory_space<vmem>>, %arg4: memref<128x128xbf16, #tpu.memory_space<vmem>>, %arg5: memref<256x128xf32, #tpu.memory_space<vmem>>, %arg6: memref<256x128xf32, #tpu.memory_space<vmem>>) attributes {dimension_semantics = [#tpu.dimension_semantics<parallel>, #tpu.dimension_semantics<parallel>, #tpu.dimension_semantics<arbitrary>], iteration_bounds = array<i64: 2, 1, 1>, scalar_prefetch = 0 : i64, scratch_operands = 1 : i64, tpu.core_type = #tpu.core_type<tc>, window_params = [{transform_indices = @transform_0, window_bounds = array<i64: 256, 128>}, {transform_indices = @transform_1, window_bounds = array<i64: 128, 128>}, {transform_indices = @transform_2, window_bounds = array<i64: 256, 128>}]} {
    %c0_i32 = arith.constant 0 : i32
    %0 = arith.cmpi eq, %arg2, %c0_i32 : i32
    %1 = arith.extui %0 : i1 to i32
    %c0_i32_0 = arith.constant 0 : i32
    %2 = arith.cmpi ne, %1, %c0_i32_0 : i32
    scf.if %2 {
      %cst_10 = arith.constant 0.000000e+00 : f32
      %12 = vector.broadcast %cst_10 : f32 to vector<256x128xf32>
      %c0_11 = arith.constant 0 : index
      %c0_12 = arith.constant 0 : index
      %13 = vector.load %arg6[%c0_11, %c0_12] : memref<256x128xf32, #tpu.memory_space<vmem>>, vector<256x128xf32>
      tpu.vector_store %arg6[%c0_11, %c0_12], %12 {strides = array<i32>} : memref<256x128xf32, #tpu.memory_space<vmem>>, vector<256x128xf32>,
    } else {
    }
    %c0 = arith.constant 0 : index
    %c0_1 = arith.constant 0 : index
    %3 = vector.load %arg6[%c0, %c0_1] : memref<256x128xf32, #tpu.memory_space<vmem>>, vector<256x128xf32>
    %c0_2 = arith.constant 0 : index
    %c0_3 = arith.constant 0 : index
    %4 = vector.load %arg3[%c0_2, %c0_3] : memref<256x128xbf16, #tpu.memory_space<vmem>>, vector<256x128xbf16>
    %c0_4 = arith.constant 0 : index
    %c0_5 = arith.constant 0 : index
    %5 = vector.load %arg4[%c0_4, %c0_5] : memref<128x128xbf16, #tpu.memory_space<vmem>>, vector<128x128xbf16>
    %cst = arith.constant dense<0.000000e+00> : vector<256x128xf32>
    %6 = tpu.matmul %4, %5, %cst {dimension_numbers = #tpu.dot_dimension_numbers<[1], [0], [0], [1], [0, 0, 1, 1], [], []>} : vector<256x128xbf16>, vector<128x128xbf16>, vector<256x128xf32> -> vector<256x128xf32>
    %7 = arith.addf %3, %6 : vector<256x128xf32>
    %c0_6 = arith.constant 0 : index
    %c0_7 = arith.constant 0 : index
    %8 = vector.load %arg6[%c0_6, %c0_7] : memref<256x128xf32, #tpu.memory_space<vmem>>, vector<256x128xf32>
    tpu.vector_store %arg6[%c0_6, %c0_7], %7 {strides = array<i32>} : memref<256x128xf32, #tpu.memory_space<vmem>>, vector<256x128xf32>,
    %c0_i32_8 = arith.constant 0 : i32
    %9 = arith.cmpi eq, %arg2, %c0_i32_8 : i32
    %10 = arith.extui %9 : i1 to i32
    %c0_i32_9 = arith.constant 0 : i32
    %11 = arith.cmpi ne, %10, %c0_i32_9 : i32
    scf.if %11 {
      %c0_10 = arith.constant 0 : index
      %c0_11 = arith.constant 0 : index
      %12 = vector.load %arg6[%c0_10, %c0_11] : memref<256x128xf32, #tpu.memory_space<vmem>>, vector<256x128xf32>
      %c0_12 = arith.constant 0 : index
      %c0_13 = arith.constant 0 : index
      %13 = vector.load %arg5[%c0_12, %c0_13] : memref<256x128xf32, #tpu.memory_space<vmem>>, vector<256x128xf32>
      tpu.vector_store %arg5[%c0_12, %c0_13], %12 {strides = array<i32>} : memref<256x128xf32, #tpu.memory_space<vmem>>, vector<256x128xf32>,
    } else {
    }
    return
  }
  func.func @transform_0(%arg0: i32, %arg1: i32, %arg2: i32) -> (i32, i32) {
    %c0_i32 = arith.constant 0 : i32
    return %arg0, %arg2 : i32, i32
  }
  func.func @transform_1(%arg0: i32, %arg1: i32, %arg2: i32) -> (i32, i32) {
    %c0_i32 = arith.constant 0 : i32
    return %arg2, %arg1 : i32, i32
  }
  func.func @transform_2(%arg0: i32, %arg1: i32, %arg2: i32) -> (i32, i32) {
    %c0_i32 = arith.constant 0 : i32
    return %arg0, %arg1 : i32, i32
  }
}

</mosaic_0001>

<llo_original>
// kernel: pallas_matmul.1
$region0: #{pallas_matmul.1}
  #allocation0 [shape = 'u32[]', space=smem, size = 0x4, offset = 0x4, fixed_abs, tag = 'smem constant byte address 0x4 - core index']
  #allocation1 [shape = 'u32[144,128]{1,0:T(1,128)}', space=vmem, size = 0x12000, scoped, tag = 'internal scratch']
  #allocation2 [shape = 'f32[256,128]{1,0:T(8,128)}', space=vmem, size = 0x20000, scoped, tag = 'scratch operand']
  %s0 = inlined_call_operand.vmem [shape: bf16[512,128], index: 0, kind: input, shape index: {}]
  %s1 = inlined_call_operand.vmem [shape: bf16[128,128], index: 1, kind: input, shape index: {}]
  %s2 = inlined_call_operand.vmem [shape: f32[512,128], index: 2, kind: output, shape index: {}]
  %s3 = sld [smem:[#allocation0]]
  $region49: #{pallas_matmul.1} parent=0
    _
  %s5 = ssub.s32 1, %s3
  %s6 = scalar_select 0, %s5, %s3
  loop: start=0, step=1, limit=4
  $region2: #{pallas_matmul.1} parent=0 // loop_pre_header
    _
  $region3: #{pallas_matmul.1} parent=0 // loop_header
    %s8 = sphi 0, %s12
    %p9 = scmp.ge.s32.totalorder %s8, 4
    %s15 = sphi 0, %s34
    %s16 = sphi 0, %s30
    %s17 = sphi 0, %s26
    %s18 = sphi 0, %s15
    %s19 = sphi 0, %s16
    %s20 = sphi 0, %s17
    %s21 = sphi 0, %s18
    %s22 = sphi 0, %s19
    %s23 = sphi 0, %s20
    %s39 = sphi 0, %s41
    %s42 = sphi 0, %s39
    %s43 = sphi 0, %s42
    %s59 = sphi 0, %s43
    %s67 = sphi 0, %s69
    %s70 = sphi 0, %s67
    %s71 = sphi 0, %s70
    %s87 = sphi 0, %s71
    %s95 = sphi 0, %s97
    %s98 = sphi 0, %s95
    %s99 = sphi 0, %s98
    %s115 = sphi 0, %s99
  $region4: #{pallas_matmul.1} parent=0 // loop_header_branch
    %11 = sbr.rel (%p9) target = $region8
  $region5: #{pallas_matmul.1} parent=0 // loop_body
    %s13 = ssub.s32 %s8, 1
    %s14 = ssub.s32 %s8, 2
    %s24 = sadd.s32 1, %s17
    %p25 = scmp.ge.s32.totalorder %s24, 1
    %s26 = scalar_select %p25, 0, %s24
    %s27 = sadd.s32 1, %s16
    %s28 = scalar_select %p25, %s27, %s16
    %p29 = scmp.ge.s32.totalorder %s28, 1
    %s30 = scalar_select %p29, 0, %s28
    %s31 = sadd.s32 1, %s15
    %s32 = scalar_select %p29, %s31, %s15
    %p33 = scmp.ge.s32.totalorder %s32, 2
    %s34 = scalar_select %p33, 0, %s32
    %s35 = ssub.s32 %s15, %s34
    %s36 = ssub.s32 %s17, %s26
    %s37 = sor.u32 %s35, %s36
    %p38 = scmp.eq.s32.totalorder %s37, 0
    %s40 = sadd.s32 %s39, 1
    %s41 = scalar_select %p38, %s39, %s40
    %p44 = pneg %p38
    %p45 = scmp.eq.s32.totalorder %s8, 1
    %p46 = por %p44, %p45
    %p47 = scmp.ne.s32.totalorder %s39, %s42
    %p48 = scmp.eq.s32.totalorder %s8, 0
    %p49 = por %p47, %p48
    %p50 = scmp.ne.s32.totalorder %s39, %s42
    %p51 = scmp.eq.s32.totalorder %s13, 1
    %p52 = por %p50, %p51
    %p53 = scmp.ne.s32.totalorder %s42, %s43
    %p54 = scmp.eq.s32.totalorder %s13, 0
    %p55 = por %p53, %p54
    %p56 = scmp.ne.s32.totalorder %s42, %s43
    %p57 = scmp.eq.s32.totalorder %s14, 1
    %p58 = por %p56, %p57
    %p60 = scmp.ne.s32.totalorder %s43, %s59
    %p61 = scmp.eq.s32.totalorder %s14, 0
    %p62 = por %p60, %p61
    %s63 = ssub.s32 %s17, %s26
    %s64 = ssub.s32 %s16, %s30
    %s65 = sor.u32 %s63, %s64
    %p66 = scmp.eq.s32.totalorder %s65, 0
    %s68 = sadd.s32 %s67, 1
    %s69 = scalar_select %p66, %s67, %s68
    %p72 = pneg %p66
    %p73 = scmp.eq.s32.totalorder %s8, 1
    %p74 = por %p72, %p73
    %p75 = scmp.ne.s32.totalorder %s67, %s70
    %p76 = scmp.eq.s32.totalorder %s8, 0
    %p77 = por %p75, %p76
    %p78 = scmp.ne.s32.totalorder %s67, %s70
    %p79 = scmp.eq.s32.totalorder %s13, 1
    %p80 = por %p78, %p79
    %p81 = scmp.ne.s32.totalorder %s70, %s71
    %p82 = scmp.eq.s32.totalorder %s13, 0
    %p83 = por %p81, %p82
    %p84 = scmp.ne.s32.totalorder %s70, %s71
    %p85 = scmp.eq.s32.totalorder %s14, 1
    %p86 = por %p84, %p85
    %p88 = scmp.ne.s32.totalorder %s71, %s87
    %p89 = scmp.eq.s32.totalorder %s14, 0
    %p90 = por %p88, %p89
    %s91 = ssub.s32 %s15, %s34
    %s92 = ssub.s32 %s16, %s30
    %s93 = sor.u32 %s91, %s92
    %p94 = scmp.eq.s32.totalorder %s93, 0
    %s96 = sadd.s32 %s95, 1
    %s97 = scalar_select %p94, %s95, %s96
    %p100 = pneg %p94
    %p101 = scmp.eq.s32.totalorder %s8, 1
    %p102 = por %p100, %p101
    %p103 = scmp.ne.s32.totalorder %s95, %s98
    %p104 = scmp.eq.s32.totalorder %s8, 0
    %p105 = por %p103, %p104
    %p106 = scmp.ne.s32.totalorder %s95, %s98
    %p107 = scmp.eq.s32.totalorder %s13, 1
    %p108 = por %p106, %p107
    %p109 = scmp.ne.s32.totalorder %s98, %s99
    %p110 = scmp.eq.s32.totalorder %s13, 0
    %p111 = por %p109, %p110
    %p112 = scmp.ne.s32.totalorder %s98, %s99
    %p113 = scmp.eq.s32.totalorder %s14, 1
    %p114 = por %p112, %p113
    %p116 = scmp.ne.s32.totalorder %s99, %s115
    %p117 = scmp.eq.s32.totalorder %s14, 0
    %p118 = por %p116, %p117
    %p119 = scmp.le.s32.totalorder 1, %s8
    %p120 = scmp.lt.s32.totalorder %s8, 3
    %p121 = pnand %p119, %p120
    %p122 = pneg %p121
    // Predicated region
    $region9: #{pallas_matmul.1} parent=5 // pred_check
      _
    $region10: #{pallas_matmul.1} parent=5 // pred_check_branch
      %124 = sbr.rel (%p121) target = $region12
    $region11: #{pallas_matmul.1} parent=5 // pred_region
      %s125 = ssub.s32 %s8, 1
      // Predicated region
      $region13: #{pallas_matmul.1} parent=11 // pred_check
        %p126 = pneg %p83
      $region14: #{pallas_matmul.1} parent=11 // pred_check_branch
        %128 = sbr.rel (%p126) target = $region16
      $region15: #{pallas_matmul.1} parent=11 // pred_region
        %s129 = smul.u32 16, %s20
        %p130 = scmp.lt.s32.totalorder %s129, 15
        %s131 = scalar_select %p130, %s129, 15
        %p132 = scmp.lt.s32.totalorder %s19, 0
        %s133 = scalar_select %p132, %s19, 0
        %s134 = sadd.s32 %s133, %s131
        %s135 = smul.addr %s134, 4
        %s136 = scalar_lea.vmem %s1, %s135
        %s137 = smul.u32 16, %s20
      $region16: #{pallas_matmul.1} parent=11 // pred_fallthru
        _
    $region12: #{pallas_matmul.1} parent=5 // pred_fallthru
      _
    %p138 = scmp.lt.s32.totalorder %s8, 2
    // Predicated region
    $region17: #{pallas_matmul.1} parent=5 // pred_check
      %p139 = pneg %p138
    $region18: #{pallas_matmul.1} parent=5 // pred_check_branch
      %141 = sbr.rel (%p139) target = $region20
    $region19: #{pallas_matmul.1} parent=5 // pred_region
      // Predicated region
      $region21: #{pallas_matmul.1} parent=19 // pred_check
        %p142 = pneg %p49
      $region22: #{pallas_matmul.1} parent=19 // pred_check_branch
        %144 = sbr.rel (%p142) target = $region24
      $region23: #{pallas_matmul.1} parent=19 // pred_region
        %s145 = smul.u32 32, %s15
        %p146 = scmp.lt.s32.totalorder %s145, 63
        %s147 = scalar_select %p146, %s145, 63
        %p148 = scmp.lt.s32.totalorder %s17, 0
        %s149 = scalar_select %p148, %s17, 0
        %s150 = sadd.s32 %s149, %s147
        %s151 = smul.addr %s150, 4
        %s152 = scalar_lea.vmem %s0, %s151
        %s153 = smul.u32 32, %s15
      $region24: #{pallas_matmul.1} parent=19 // pred_fallthru
        _
    $region20: #{pallas_matmul.1} parent=5 // pred_fallthru
      _
    %p154 = scmp.le.s32.totalorder 1, %s8
    %p155 = scmp.lt.s32.totalorder %s8, 3
    %p156 = pnand %p154, %p155
    %p157 = pneg %p156
    // Predicated region
    $region25: #{pallas_matmul.1} parent=5 // pred_check
      _
    $region26: #{pallas_matmul.1} parent=5 // pred_check_branch
      %159 = sbr.rel (%p156) target = $region28
    $region27: #{pallas_matmul.1} parent=5 // pred_region
      %s160 = ssub.s32 %s8, 1
      %s161 = smul.u32 32, %s18
      %p162 = scmp.lt.s32.totalorder %s161, 63
      %s163 = scalar_select %p162, %s161, 63
      %p164 = scmp.lt.s32.totalorder %s20, 0
      %s165 = scalar_select %p164, %s20, 0
      %s166 = sadd.s32 %s165, %s163
      %s167 = smul.addr %s166, 4
      %s168 = scalar_lea.vmem %s0, %s167
      %p169 = pneg %p55
      %p170 = pneg %p52
      %s171 = smul.u32 16, %s20
      %p172 = scmp.lt.s32.totalorder %s171, 15
      %s173 = scalar_select %p172, %s171, 15
      %p174 = scmp.lt.s32.totalorder %s19, 0
      %s175 = scalar_select %p174, %s19, 0
      %s176 = sadd.s32 %s175, %s173
      %s177 = smul.addr %s176, 4
      %s178 = scalar_lea.vmem %s1, %s177
      %p179 = pneg %p83
      %p180 = pneg %p80
      %p181 = pneg %p111
      %p182 = pneg %p108
      %s183 = smul.u32 32, %s18
      %p184 = scmp.lt.s32.totalorder %s183, 63
      %s185 = scalar_select %p184, %s183, 63
      %p186 = scmp.lt.s32.totalorder %s19, 0
      %s187 = scalar_select %p186, %s19, 0
      %s188 = sadd.s32 %s187, %s185
      %s189 = smul.addr %s188, 8
      %s190 = scalar_lea.vmem %s2, %s189
      %s191 = smul.u32 32, %s18
      %p192 = scmp.lt.s32.totalorder %s191, 63
      %s193 = scalar_select %p192, %s191, 63
      %p194 = scmp.lt.s32.totalorder %s20, 0
      %s195 = scalar_select %p194, %s20, 0
      %s196 = sadd.s32 %s195, %s193
      %s197 = smul.addr %s196, 4
      %s198 = scalar_lea.vmem %s0, %s197
      %s199 = smul.u32 32, %s18
      %s200 = smul.u32 16, %s20
      %p201 = scmp.lt.s32.totalorder %s200, 15
      %s202 = scalar_select %p201, %s200, 15
      %p203 = scmp.lt.s32.totalorder %s19, 0
      %s204 = scalar_select %p203, %s19, 0
      %s205 = sadd.s32 %s204, %s202
      %s206 = smul.addr %s205, 4
      %s207 = scalar_lea.vmem %s1, %s206
      %s208 = smul.u32 16, %s20
      %s209 = smul.u32 32, %s18
      %p210 = scmp.lt.s32.totalorder %s209, 63
      %s211 = scalar_select %p210, %s209, 63
      %p212 = scmp.lt.s32.totalorder %s19, 0
      %s213 = scalar_select %p212, %s19, 0
      %s214 = sadd.s32 %s213, %s211
      %s215 = smul.addr %s214, 8
      %s216 = scalar_lea.vmem %s2, %s215
      %s217 = smul.u32 32, %s18
      %p219 = scmp.eq.s32.totalorder %s20, 0
      // Predicated region
      $region29: #{pallas_matmul.1} parent=27 // pred_check
        %p220 = pneg %p219
      $region30: #{pallas_matmul.1} parent=27 // pred_check_branch
        %222 = sbr.rel (%p220) target = $region32
      $region31: #{pallas_matmul.1} parent=27 // pred_region
        %223 = vst [vmem:[#allocation2] sm:$0xff] 0.0
        %224 = vst [vmem:[#allocation2 + $0x8] sm:$0xff] 0.0
        %225 = vst [vmem:[#allocation2 + $0x10] sm:$0xff] 0.0
        %226 = vst [vmem:[#allocation2 + $0x18] sm:$0xff] 0.0
        %227 = vst [vmem:[#allocation2 + $0x20] sm:$0xff] 0.0
        %228 = vst [vmem:[#allocation2 + $0x28] sm:$0xff] 0.0
        %229 = vst [vmem:[#allocation2 + $0x30] sm:$0xff] 0.0
        %230 = vst [vmem:[#allocation2 + $0x38] sm:$0xff] 0.0
        %231 = vst [vmem:[#allocation2 + $0x40] sm:$0xff] 0.0
        %232 = vst [vmem:[#allocation2 + $0x48] sm:$0xff] 0.0
        %233 = vst [vmem:[#allocation2 + $0x50] sm:$0xff] 0.0
        %234 = vst [vmem:[#allocation2 + $0x58] sm:$0xff] 0.0
        %235 = vst [vmem:[#allocation2 + $0x60] sm:$0xff] 0.0
        %236 = vst [vmem:[#allocation2 + $0x68] sm:$0xff] 0.0
        %237 = vst [vmem:[#allocation2 + $0x70] sm:$0xff] 0.0
        %238 = vst [vmem:[#allocation2 + $0x78] sm:$0xff] 0.0
        %239 = vst [vmem:[#allocation2 + $0x80] sm:$0xff] 0.0
        %240 = vst [vmem:[#allocation2 + $0x88] sm:$0xff] 0.0
        %241 = vst [vmem:[#allocation2 + $0x90] sm:$0xff] 0.0
        %242 = vst [vmem:[#allocation2 + $0x98] sm:$0xff] 0.0
        %243 = vst [vmem:[#allocation2 + $0xa0] sm:$0xff] 0.0
        %244 = vst [vmem:[#allocation2 + $0xa8] sm:$0xff] 0.0
        %245 = vst [vmem:[#allocation2 + $0xb0] sm:$0xff] 0.0
        %246 = vst [vmem:[#allocation2 + $0xb8] sm:$0xff] 0.0
        %247 = vst [vmem:[#allocation2 + $0xc0] sm:$0xff] 0.0
        %248 = vst [vmem:[#allocation2 + $0xc8] sm:$0xff] 0.0
        %249 = vst [vmem:[#allocation2 + $0xd0] sm:$0xff] 0.0
        %250 = vst [vmem:[#allocation2 + $0xd8] sm:$0xff] 0.0
        %251 = vst [vmem:[#allocation2 + $0xe0] sm:$0xff] 0.0
        %252 = vst [vmem:[#allocation2 + $0xe8] sm:$0xff] 0.0
        %253 = vst [vmem:[#allocation2 + $0xf0] sm:$0xff] 0.0
        %254 = vst [vmem:[#allocation2 + $0xf8] sm:$0xff] 0.0
      $region32: #{pallas_matmul.1} parent=27 // pred_fallthru
        _
      %v255 = vld [vmem:[#allocation2] sm:$0xff]
      %v256 = vld [vmem:[#allocation2 + $0x8] sm:$0xff]
      %v257 = vld [vmem:[#allocation2 + $0x10] sm:$0xff]
      %v258 = vld [vmem:[#allocation2 + $0x18] sm:$0xff]
      %v259 = vld [vmem:[#allocation2 + $0x20] sm:$0xff]
      %v260 = vld [vmem:[#allocation2 + $0x28] sm:$0xff]
      %v261 = vld [vmem:[#allocation2 + $0x30] sm:$0xff]
      %v262 = vld [vmem:[#allocation2 + $0x38] sm:$0xff]
      %v263 = vld [vmem:[#allocation2 + $0x40] sm:$0xff]
      %v264 = vld [vmem:[#allocation2 + $0x48] sm:$0xff]
      %v265 = vld [vmem:[#allocation2 + $0x50] sm:$0xff]
      %v266 = vld [vmem:[#allocation2 + $0x58] sm:$0xff]
      %v267 = vld [vmem:[#allocation2 + $0x60] sm:$0xff]
      %v268 = vld [vmem:[#allocation2 + $0x68] sm:$0xff]
      %v269 = vld [vmem:[#allocation2 + $0x70] sm:$0xff]
      %v270 = vld [vmem:[#allocation2 + $0x78] sm:$0xff]
      %v271 = vld [vmem:[#allocation2 + $0x80] sm:$0xff]
      %v272 = vld [vmem:[#allocation2 + $0x88] sm:$0xff]
      %v273 = vld [vmem:[#allocation2 + $0x90] sm:$0xff]
      %v274 = vld [vmem:[#allocation2 + $0x98] sm:$0xff]
      %v275 = vld [vmem:[#allocation2 + $0xa0] sm:$0xff]
      %v276 = vld [vmem:[#allocation2 + $0xa8] sm:$0xff]
      %v277 = vld [vmem:[#allocation2 + $0xb0] sm:$0xff]
      %v278 = vld [vmem:[#allocation2 + $0xb8] sm:$0xff]
      %v279 = vld [vmem:[#allocation2 + $0xc0] sm:$0xff]
      %v280 = vld [vmem:[#allocation2 + $0xc8] sm:$0xff]
      %v281 = vld [vmem:[#allocation2 + $0xd0] sm:$0xff]
      %v282 = vld [vmem:[#allocation2 + $0xd8] sm:$0xff]
      %v283 = vld [vmem:[#allocation2 + $0xe0] sm:$0xff]
      %v284 = vld [vmem:[#allocation2 + $0xe8] sm:$0xff]
      %v285 = vld [vmem:[#allocation2 + $0xf0] sm:$0xff]
      %v286 = vld [vmem:[#allocation2 + $0xf8] sm:$0xff]
      %v287 = vld [vmem:[%s198] sm:$0xf]
      %v288 = vld [vmem:[%s198 + $0x4] sm:$0xf]
      %v289 = vld [vmem:[%s198 + $0x8] sm:$0xf]
      %v290 = vld [vmem:[%s198 + $0xc] sm:$0xf]
      %v291 = vld [vmem:[%s198 + $0x10] sm:$0xf]
      %v292 = vld [vmem:[%s198 + $0x14] sm:$0xf]
      %v293 = vld [vmem:[%s198 + $0x18] sm:$0xf]
      %v294 = vld [vmem:[%s198 + $0x1c] sm:$0xf]
      %v295 = vld [vmem:[%s198 + $0x20] sm:$0xf]
      %v296 = vld [vmem:[%s198 + $0x24] sm:$0xf]
      %v297 = vld [vmem:[%s198 + $0x28] sm:$0xf]
      %v298 = vld [vmem:[%s198 + $0x2c] sm:$0xf]
      %v299 = vld [vmem:[%s198 + $0x30] sm:$0xf]
      %v300 = vld [vmem:[%s198 + $0x34] sm:$0xf]
      %v301 = vld [vmem:[%s198 + $0x38] sm:$0xf]
      %v302 = vld [vmem:[%s198 + $0x3c] sm:$0xf]
      %v303 = vld [vmem:[%s198 + $0x40] sm:$0xf]
      %v304 = vld [vmem:[%s198 + $0x44] sm:$0xf]
      %v305 = vld [vmem:[%s198 + $0x48] sm:$0xf]
      %v306 = vld [vmem:[%s198 + $0x4c] sm:$0xf]
      %v307 = vld [vmem:[%s198 + $0x50] sm:$0xf]
      %v308 = vld [vmem:[%s198 + $0x54] sm:$0xf]
      %v309 = vld [vmem:[%s198 + $0x58] sm:$0xf]
      %v310 = vld [vmem:[%s198 + $0x5c] sm:$0xf]
      %v311 = vld [vmem:[%s198 + $0x60] sm:$0xf]
      %v312 = vld [vmem:[%s198 + $0x64] sm:$0xf]
      %v313 = vld [vmem:[%s198 + $0x68] sm:$0xf]
      %v314 = vld [vmem:[%s198 + $0x6c] sm:$0xf]
      %v315 = vld [vmem:[%s198 + $0x70] sm:$0xf]
      %v316 = vld [vmem:[%s198 + $0x74] sm:$0xf]
      %v317 = vld [vmem:[%s198 + $0x78] sm:$0xf]
      %v318 = vld [vmem:[%s198 + $0x7c] sm:$0xf]
      %v319 = vld [vmem:[%s207] sm:$0xf]
      %v320 = vld [vmem:[%s207 + $0x4] sm:$0xf]
      %v321 = vld [vmem:[%s207 + $0x8] sm:$0xf]
      %v322 = vld [vmem:[%s207 + $0xc] sm:$0xf]
      %v323 = vld [vmem:[%s207 + $0x10] sm:$0xf]
      %v324 = vld [vmem:[%s207 + $0x14] sm:$0xf]
      %v325 = vld [vmem:[%s207 + $0x18] sm:$0xf]
      %v326 = vld [vmem:[%s207 + $0x1c] sm:$0xf]
      %v327 = vld [vmem:[%s207 + $0x20] sm:$0xf]
      %v328 = vld [vmem:[%s207 + $0x24] sm:$0xf]
      %v329 = vld [vmem:[%s207 + $0x28] sm:$0xf]
      %v330 = vld [vmem:[%s207 + $0x2c] sm:$0xf]
      %v331 = vld [vmem:[%s207 + $0x30] sm:$0xf]
      %v332 = vld [vmem:[%s207 + $0x34] sm:$0xf]
      %v333 = vld [vmem:[%s207 + $0x38] sm:$0xf]
      %v334 = vld [vmem:[%s207 + $0x3c] sm:$0xf]
      %v367 = vunpack.c.l.b16 %v287
      %v368 = vunpack.c.l.b16 %v288
      %v369 = vunpack.c.l.b16 %v289
      %v370 = vunpack.c.l.b16 %v290
      %v371 = vunpack.c.l.b16 %v291
      %v372 = vunpack.c.l.b16 %v292
      %v373 = vunpack.c.l.b16 %v293
      %v374 = vunpack.c.l.b16 %v294
      %v375 = vunpack.c.l.b16 %v295
      %v376 = vunpack.c.l.b16 %v296
      %v377 = vunpack.c.l.b16 %v297
      %v378 = vunpack.c.l.b16 %v298
      %v379 = vunpack.c.l.b16 %v299
      %v380 = vunpack.c.l.b16 %v300
      %v381 = vunpack.c.l.b16 %v301
      %v382 = vunpack.c.l.b16 %v302
      %v383 = vunpack.c.l.b16 %v303
      %v384 = vunpack.c.l.b16 %v304
      %v385 = vunpack.c.l.b16 %v305
      %v386 = vunpack.c.l.b16 %v306
      %v387 = vunpack.c.l.b16 %v307
      %v388 = vunpack.c.l.b16 %v308
      %v389 = vunpack.c.l.b16 %v309
      %v390 = vunpack.c.l.b16 %v310
      %v391 = vunpack.c.l.b16 %v311
      %v392 = vunpack.c.l.b16 %v312
      %v393 = vunpack.c.l.b16 %v313
      %v394 = vunpack.c.l.b16 %v314
      %v395 = vunpack.c.l.b16 %v315
      %v396 = vunpack.c.l.b16 %v316
      %v397 = vunpack.c.l.b16 %v317
      %v398 = vunpack.c.l.b16 %v318
      %v399 = vpack.c.b16 %v368, %v367
      %v400 = vpack.c.b16 %v370, %v369
      %v401 = vpack.c.b16 %v372, %v371
      %v402 = vpack.c.b16 %v374, %v373
      %v403 = vpack.c.b16 %v376, %v375
      %v404 = vpack.c.b16 %v378, %v377
      %v405 = vpack.c.b16 %v380, %v379
      %v406 = vpack.c.b16 %v382, %v381
      %v407 = vpack.c.b16 %v384, %v383
      %v408 = vpack.c.b16 %v386, %v385
      %v409 = vpack.c.b16 %v388, %v387
      %v410 = vpack.c.b16 %v390, %v389
      %v411 = vpack.c.b16 %v392, %v391
      %v412 = vpack.c.b16 %v394, %v393
      %v413 = vpack.c.b16 %v396, %v395
      %v414 = vpack.c.b16 %v398, %v397
      %v447 = vunpack.c.l.b16 %v319
      %v448 = vunpack.c.l.b16 %v320
      %v449 = vunpack.c.l.b16 %v321
      %v450 = vunpack.c.l.b16 %v322
      %v451 = vunpack.c.l.b16 %v323
      %v452 = vunpack.c.l.b16 %v324
      %v453 = vunpack.c.l.b16 %v325
      %v454 = vunpack.c.l.b16 %v326
      %v455 = vunpack.c.l.b16 %v327
      %v456 = vunpack.c.l.b16 %v328
      %v457 = vunpack.c.l.b16 %v329
      %v458 = vunpack.c.l.b16 %v330
      %v459 = vunpack.c.l.b16 %v331
      %v460 = vunpack.c.l.b16 %v332
      %v461 = vunpack.c.l.b16 %v333
      %v462 = vunpack.c.l.b16 %v334
      %v463 = vpack.c.b16 %v448, %v447
      %v464 = vpack.c.b16 %v450, %v449
      %v465 = vpack.c.b16 %v452, %v451
      %v466 = vpack.c.b16 %v454, %v453
      %v467 = vpack.c.b16 %v456, %v455
      %v468 = vpack.c.b16 %v458, %v457
      %v469 = vpack.c.b16 %v460, %v459
      %v470 = vpack.c.b16 %v462, %v461
      %479 = vmatprep.subr.bf16.mxu0 0
      %480 = vmatpush1.bf16.msra.mxu0 %v463
      %481 = vmatprep.subr.bf16.mxu0 0
      %482 = vmatpush1.bf16.msra.mxu0 %v464
      %483 = vmatprep.subr.bf16.mxu0 0
      %484 = vmatpush1.bf16.msra.mxu0 %v465
      %485 = vmatprep.subr.bf16.mxu0 0
      %486 = vmatpush1.bf16.msra.mxu0 %v466
      %487 = vmatprep.subr.bf16.mxu0 0
      %488 = vmatpush1.bf16.msra.mxu0 %v467
      %489 = vmatprep.subr.bf16.mxu0 0
      %490 = vmatpush1.bf16.msra.mxu0 %v468
      %491 = vmatprep.subr.bf16.mxu0 0
      %492 = vmatpush1.bf16.msra.mxu0 %v469
      %493 = vmatprep.subr.bf16.mxu0 0
      %494 = vmatpush1.bf16.msra.mxu0 %v470
      %495 = vmatprep.subr.bf16.mxu0 0
      %496 = vmatpush1.bf16.msra.mxu0 0
      %497 = vmatprep.subr.bf16.mxu0 0
      %498 = vmatpush1.bf16.msra.mxu0 0
      %499 = vmatprep.subr.bf16.mxu0 0
      %500 = vmatpush1.bf16.msra.mxu0 0
      %501 = vmatprep.subr.bf16.mxu0 0
      %502 = vmatpush1.bf16.msra.mxu0 0
      %503 = vmatprep.subr.bf16.mxu0 0
      %504 = vmatpush1.bf16.msra.mxu0 0
      %505 = vmatprep.subr.bf16.mxu0 0
      %506 = vmatpush1.bf16.msra.mxu0 0
      %507 = vmatprep.subr.bf16.mxu0 0
      %508 = vmatpush1.bf16.msra.mxu0 0
      %509 = vmatprep.subr.bf16.mxu0 0
      %510 = vmatpush1.bf16.msra.mxu0 0
      %511 = vmatprep.mubr.bf16.mxu0 0
      %512 = vmatmul.mubr.bf16.gmra.mrb[0].mxu0 %v399
      %v513 = vpop.f32.mrb[0].mxu0
      %v514 = vadd.f32 0.0, %v513
      %v515 = vpop.f32.mrb[0].mxu0
      %v516 = vpop.f32.mrb[0].mxu0
      %v517 = vadd.f32 0.0, %v516
      %v518 = vpop.f32.mrb[0].mxu0
      %519 = vmatprep.mubr.bf16.mxu0 0
      %520 = vmatmul.mubr.bf16.gmra.mrb[0].mxu0 %v400
      %v521 = vpop.f32.mrb[0].mxu0
      %v522 = vadd.f32 0.0, %v521
      %v523 = vpop.f32.mrb[0].mxu0
      %v524 = vpop.f32.mrb[0].mxu0
      %v525 = vadd.f32 0.0, %v524
      %v526 = vpop.f32.mrb[0].mxu0
      %527 = vmatprep.mubr.bf16.mxu0 0
      %528 = vmatmul.mubr.bf16.gmra.mrb[0].mxu0 %v401
      %v529 = vpop.f32.mrb[0].mxu0
      %v530 = vadd.f32 0.0, %v529
      %v531 = vpop.f32.mrb[0].mxu0
      %v532 = vpop.f32.mrb[0].mxu0
      %v533 = vadd.f32 0.0, %v532
      %v534 = vpop.f32.mrb[0].mxu0
      %535 = vmatprep.mubr.bf16.mxu0 0
      %536 = vmatmul.mubr.bf16.gmra.mrb[0].mxu0 %v402
      %v537 = vpop.f32.mrb[0].mxu0
      %v538 = vadd.f32 0.0, %v537
      %v539 = vpop.f32.mrb[0].mxu0
      %v540 = vpop.f32.mrb[0].mxu0
      %v541 = vadd.f32 0.0, %v540
      %v542 = vpop.f32.mrb[0].mxu0
      %543 = vmatprep.mubr.bf16.mxu0 0
      %544 = vmatmul.mubr.bf16.gmra.mrb[0].mxu0 %v403
      %v545 = vpop.f32.mrb[0].mxu0
      %v546 = vadd.f32 0.0, %v545
      %v547 = vpop.f32.mrb[0].mxu0
      %v548 = vpop.f32.mrb[0].mxu0
      %v549 = vadd.f32 0.0, %v548
      %v550 = vpop.f32.mrb[0].mxu0
      %551 = vmatprep.mubr.bf16.mxu0 0
      %552 = vmatmul.mubr.bf16.gmra.mrb[0].mxu0 %v404
      %v553 = vpop.f32.mrb[0].mxu0
      %v554 = vadd.f32 0.0, %v553
      %v555 = vpop.f32.mrb[0].mxu0
      %v556 = vpop.f32.mrb[0].mxu0
      %v557 = vadd.f32 0.0, %v556
      %v558 = vpop.f32.mrb[0].mxu0
      %559 = vmatprep.mubr.bf16.mxu0 0
      %560 = vmatmul.mubr.bf16.gmra.mrb[0].mxu0 %v405
      %v561 = vpop.f32.mrb[0].mxu0
      %v562 = vadd.f32 0.0, %v561
      %v563 = vpop.f32.mrb[0].mxu0
      %v564 = vpop.f32.mrb[0].mxu0
      %v565 = vadd.f32 0.0, %v564
      %v566 = vpop.f32.mrb[0].mxu0
      %567 = vmatprep.mubr.bf16.mxu0 0
      %568 = vmatmul.mubr.bf16.gmra.mrb[0].mxu0 %v406
      %v569 = vpop.f32.mrb[0].mxu0
      %v570 = vadd.f32 0.0, %v569
      %v571 = vpop.f32.mrb[0].mxu0
      %v572 = vpop.f32.mrb[0].mxu0
      %v573 = vadd.f32 0.0, %v572
      %v574 = vpop.f32.mrb[0].mxu0
      %575 = vmatprep.mubr.bf16.mxu0 0
      %576 = vmatmul.mubr.bf16.gmra.mrb[0].mxu0 %v407
      %v577 = vpop.f32.mrb[0].mxu0
      %v578 = vadd.f32 0.0, %v577
      %v579 = vpop.f32.mrb[0].mxu0
      %v580 = vpop.f32.mrb[0].mxu0
      %v581 = vadd.f32 0.0, %v580
      %v582 = vpop.f32.mrb[0].mxu0
      %583 = vmatprep.mubr.bf16.mxu0 0
      %584 = vmatmul.mubr.bf16.gmra.mrb[0].mxu0 %v408
      %v585 = vpop.f32.mrb[0].mxu0
      %v586 = vadd.f32 0.0, %v585
      %v587 = vpop.f32.mrb[0].mxu0
      %v588 = vpop.f32.mrb[0].mxu0
      %v589 = vadd.f32 0.0, %v588
      %v590 = vpop.f32.mrb[0].mxu0
      %591 = vmatprep.mubr.bf16.mxu0 0
      %592 = vmatmul.mubr.bf16.gmra.mrb[0].mxu0 %v409
      %v593 = vpop.f32.mrb[0].mxu0
      %v594 = vadd.f32 0.0, %v593
      %v595 = vpop.f32.mrb[0].mxu0
      %v596 = vpop.f32.mrb[0].mxu0
      %v597 = vadd.f32 0.0, %v596
      %v598 = vpop.f32.mrb[0].mxu0
      %599 = vmatprep.mubr.bf16.mxu0 0
      %600 = vmatmul.mubr.bf16.gmra.mrb[0].mxu0 %v410
      %v601 = vpop.f32.mrb[0].mxu0
      %v602 = vadd.f32 0.0, %v601
      %v603 = vpop.f32.mrb[0].mxu0
      %v604 = vpop.f32.mrb[0].mxu0
      %v605 = vadd.f32 0.0, %v604
      %v606 = vpop.f32.mrb[0].mxu0
      %607 = vmatprep.mubr.bf16.mxu0 0
      %608 = vmatmul.mubr.bf16.gmra.mrb[0].mxu0 %v411
      %v609 = vpop.f32.mrb[0].mxu0
      %v610 = vadd.f32 0.0, %v609
      %v611 = vpop.f32.mrb[0].mxu0
      %v612 = vpop.f32.mrb[0].mxu0
      %v613 = vadd.f32 0.0, %v612
      %v614 = vpop.f32.mrb[0].mxu0
      %615 = vmatprep.mubr.bf16.mxu0 0
      %616 = vmatmul.mubr.bf16.gmra.mrb[0].mxu0 %v412
      %v617 = vpop.f32.mrb[0].mxu0
      %v618 = vadd.f32 0.0, %v617
      %v619 = vpop.f32.mrb[0].mxu0
      %v620 = vpop.f32.mrb[0].mxu0
      %v621 = vadd.f32 0.0, %v620
      %v622 = vpop.f32.mrb[0].mxu0
      %623 = vmatprep.mubr.bf16.mxu0 0
      %624 = vmatmul.mubr.bf16.gmra.mrb[0].mxu0 %v413
      %v625 = vpop.f32.mrb[0].mxu0
      %v626 = vadd.f32 0.0, %v625
      %v627 = vpop.f32.mrb[0].mxu0
      %v628 = vpop.f32.mrb[0].mxu0
      %v629 = vadd.f32 0.0, %v628
      %v630 = vpop.f32.mrb[0].mxu0
      %631 = vmatprep.mubr.bf16.mxu0 0
      %632 = vmatmul.mubr.bf16.gmra.mrb[0].mxu0 %v414
      %v633 = vpop.f32.mrb[0].mxu0
      %v634 = vadd.f32 0.0, %v633
      %v635 = vpop.f32.mrb[0].mxu0
      %v636 = vpop.f32.mrb[0].mxu0
      %v637 = vadd.f32 0.0, %v636
      %v638 = vpop.f32.mrb[0].mxu0
      %639 = vdwg.mxu0
      %v640 = vadd.f32 %v255, %v514
      %v641 = vadd.f32 %v256, %v517
      %v642 = vadd.f32 %v257, %v522
      %v643 = vadd.f32 %v258, %v525
      %v644 = vadd.f32 %v259, %v530
      %v645 = vadd.f32 %v260, %v533
      %v646 = vadd.f32 %v261, %v538
      %v647 = vadd.f32 %v262, %v541
      %v648 = vadd.f32 %v263, %v546
      %v649 = vadd.f32 %v264, %v549
      %v650 = vadd.f32 %v265, %v554
      %v651 = vadd.f32 %v266, %v557
      %v652 = vadd.f32 %v267, %v562
      %v653 = vadd.f32 %v268, %v565
      %v654 = vadd.f32 %v269, %v570
      %v655 = vadd.f32 %v270, %v573
      %v656 = vadd.f32 %v271, %v578
      %v657 = vadd.f32 %v272, %v581
      %v658 = vadd.f32 %v273, %v586
      %v659 = vadd.f32 %v274, %v589
      %v660 = vadd.f32 %v275, %v594
      %v661 = vadd.f32 %v276, %v597
      %v662 = vadd.f32 %v277, %v602
      %v663 = vadd.f32 %v278, %v605
      %v664 = vadd.f32 %v279, %v610
      %v665 = vadd.f32 %v280, %v613
      %v666 = vadd.f32 %v281, %v618
      %v667 = vadd.f32 %v282, %v621
      %v668 = vadd.f32 %v283, %v626
      %v669 = vadd.f32 %v284, %v629
      %v670 = vadd.f32 %v285, %v634
      %v671 = vadd.f32 %v286, %v637
      %672 = vst [vmem:[#allocation2] sm:$0xff] %v640
      %673 = vst [vmem:[#allocation2 + $0x8] sm:$0xff] %v641
      %674 = vst [vmem:[#allocation2 + $0x10] sm:$0xff] %v642
      %675 = vst [vmem:[#allocation2 + $0x18] sm:$0xff] %v643
      %676 = vst [vmem:[#allocation2 + $0x20] sm:$0xff] %v644
      %677 = vst [vmem:[#allocation2 + $0x28] sm:$0xff] %v645
      %678 = vst [vmem:[#allocation2 + $0x30] sm:$0xff] %v646
      %679 = vst [vmem:[#allocation2 + $0x38] sm:$0xff] %v647
      %680 = vst [vmem:[#allocation2 + $0x40] sm:$0xff] %v648
      %681 = vst [vmem:[#allocation2 + $0x48] sm:$0xff] %v649
      %682 = vst [vmem:[#allocation2 + $0x50] sm:$0xff] %v650
      %683 = vst [vmem:[#allocation2 + $0x58] sm:$0xff] %v651
      %684 = vst [vmem:[#allocation2 + $0x60] sm:$0xff] %v652
      %685 = vst [vmem:[#allocation2 + $0x68] sm:$0xff] %v653
      %686 = vst [vmem:[#allocation2 + $0x70] sm:$0xff] %v654
      %687 = vst [vmem:[#allocation2 + $0x78] sm:$0xff] %v655
      %688 = vst [vmem:[#allocation2 + $0x80] sm:$0xff] %v656
      %689 = vst [vmem:[#allocation2 + $0x88] sm:$0xff] %v657
      %690 = vst [vmem:[#allocation2 + $0x90] sm:$0xff] %v658
      %691 = vst [vmem:[#allocation2 + $0x98] sm:$0xff] %v659
      %692 = vst [vmem:[#allocation2 + $0xa0] sm:$0xff] %v660
      %693 = vst [vmem:[#allocation2 + $0xa8] sm:$0xff] %v661
      %694 = vst [vmem:[#allocation2 + $0xb0] sm:$0xff] %v662
      %695 = vst [vmem:[#allocation2 + $0xb8] sm:$0xff] %v663
      %696 = vst [vmem:[#allocation2 + $0xc0] sm:$0xff] %v664
      %697 = vst [vmem:[#allocation2 + $0xc8] sm:$0xff] %v665
      %698 = vst [vmem:[#allocation2 + $0xd0] sm:$0xff] %v666
      %699 = vst [vmem:[#allocation2 + $0xd8] sm:$0xff] %v667
      %700 = vst [vmem:[#allocation2 + $0xe0] sm:$0xff] %v668
      %701 = vst [vmem:[#allocation2 + $0xe8] sm:$0xff] %v669
      %702 = vst [vmem:[#allocation2 + $0xf0] sm:$0xff] %v670
      %703 = vst [vmem:[#allocation2 + $0xf8] sm:$0xff] %v671
      // Predicated region
      $region33: #{pallas_matmul.1} parent=27 // pred_check
        %p704 = pneg %p219
      $region34: #{pallas_matmul.1} parent=27 // pred_check_branch
        %706 = sbr.rel (%p704) target = $region36
      $region35: #{pallas_matmul.1} parent=27 // pred_region
        %v707 = vld [vmem:[#allocation2] sm:$0xff]
        %v708 = vld [vmem:[#allocation2 + $0x8] sm:$0xff]
        %v709 = vld [vmem:[#allocation2 + $0x10] sm:$0xff]
        %v710 = vld [vmem:[#allocation2 + $0x18] sm:$0xff]
        %v711 = vld [vmem:[#allocation2 + $0x20] sm:$0xff]
        %v712 = vld [vmem:[#allocation2 + $0x28] sm:$0xff]
        %v713 = vld [vmem:[#allocation2 + $0x30] sm:$0xff]
        %v714 = vld [vmem:[#allocation2 + $0x38] sm:$0xff]
        %v715 = vld [vmem:[#allocation2 + $0x40] sm:$0xff]
        %v716 = vld [vmem:[#allocation2 + $0x48] sm:$0xff]
        %v717 = vld [vmem:[#allocation2 + $0x50] sm:$0xff]
        %v718 = vld [vmem:[#allocation2 + $0x58] sm:$0xff]
        %v719 = vld [vmem:[#allocation2 + $0x60] sm:$0xff]
        %v720 = vld [vmem:[#allocation2 + $0x68] sm:$0xff]
        %v721 = vld [vmem:[#allocation2 + $0x70] sm:$0xff]
        %v722 = vld [vmem:[#allocation2 + $0x78] sm:$0xff]
        %v723 = vld [vmem:[#allocation2 + $0x80] sm:$0xff]
        %v724 = vld [vmem:[#allocation2 + $0x88] sm:$0xff]
        %v725 = vld [vmem:[#allocation2 + $0x90] sm:$0xff]
        %v726 = vld [vmem:[#allocation2 + $0x98] sm:$0xff]
        %v727 = vld [vmem:[#allocation2 + $0xa0] sm:$0xff]
        %v728 = vld [vmem:[#allocation2 + $0xa8] sm:$0xff]
        %v729 = vld [vmem:[#allocation2 + $0xb0] sm:$0xff]
        %v730 = vld [vmem:[#allocation2 + $0xb8] sm:$0xff]
        %v731 = vld [vmem:[#allocation2 + $0xc0] sm:$0xff]
        %v732 = vld [vmem:[#allocation2 + $0xc8] sm:$0xff]
        %v733 = vld [vmem:[#allocation2 + $0xd0] sm:$0xff]
        %v734 = vld [vmem:[#allocation2 + $0xd8] sm:$0xff]
        %v735 = vld [vmem:[#allocation2 + $0xe0] sm:$0xff]
        %v736 = vld [vmem:[#allocation2 + $0xe8] sm:$0xff]
        %v737 = vld [vmem:[#allocation2 + $0xf0] sm:$0xff]
        %v738 = vld [vmem:[#allocation2 + $0xf8] sm:$0xff]
        %739 = vst [vmem:[%s216] sm:$0xff] %v707
        %740 = vst [vmem:[%s216 + $0x8] sm:$0xff] %v708
        %741 = vst [vmem:[%s216 + $0x10] sm:$0xff] %v709
        %742 = vst [vmem:[%s216 + $0x18] sm:$0xff] %v710
        %743 = vst [vmem:[%s216 + $0x20] sm:$0xff] %v711
        %744 = vst [vmem:[%s216 + $0x28] sm:$0xff] %v712
        %745 = vst [vmem:[%s216 + $0x30] sm:$0xff] %v713
        %746 = vst [vmem:[%s216 + $0x38] sm:$0xff] %v714
        %747 = vst [vmem:[%s216 + $0x40] sm:$0xff] %v715
        %748 = vst [vmem:[%s216 + $0x48] sm:$0xff] %v716
        %749 = vst [vmem:[%s216 + $0x50] sm:$0xff] %v717
        %750 = vst [vmem:[%s216 + $0x58] sm:$0xff] %v718
        %751 = vst [vmem:[%s216 + $0x60] sm:$0xff] %v719
        %752 = vst [vmem:[%s216 + $0x68] sm:$0xff] %v720
        %753 = vst [vmem:[%s216 + $0x70] sm:$0xff] %v721
        %754 = vst [vmem:[%s216 + $0x78] sm:$0xff] %v722
        %755 = vst [vmem:[%s216 + $0x80] sm:$0xff] %v723
        %756 = vst [vmem:[%s216 + $0x88] sm:$0xff] %v724
        %757 = vst [vmem:[%s216 + $0x90] sm:$0xff] %v725
        %758 = vst [vmem:[%s216 + $0x98] sm:$0xff] %v726
        %759 = vst [vmem:[%s216 + $0xa0] sm:$0xff] %v727
        %760 = vst [vmem:[%s216 + $0xa8] sm:$0xff] %v728
        %761 = vst [vmem:[%s216 + $0xb0] sm:$0xff] %v729
        %762 = vst [vmem:[%s216 + $0xb8] sm:$0xff] %v730
        %763 = vst [vmem:[%s216 + $0xc0] sm:$0xff] %v731
        %764 = vst [vmem:[%s216 + $0xc8] sm:$0xff] %v732
        %765 = vst [vmem:[%s216 + $0xd0] sm:$0xff] %v733
        %766 = vst [vmem:[%s216 + $0xd8] sm:$0xff] %v734
        %767 = vst [vmem:[%s216 + $0xe0] sm:$0xff] %v735
        %768 = vst [vmem:[%s216 + $0xe8] sm:$0xff] %v736
        %769 = vst [vmem:[%s216 + $0xf0] sm:$0xff] %v737
        %770 = vst [vmem:[%s216 + $0xf8] sm:$0xff] %v738
      $region36: #{pallas_matmul.1} parent=27 // pred_fallthru
        _
      %s771 = smul.u32 32, %s18
      %p772 = scmp.lt.s32.totalorder %s771, 63
      %s773 = scalar_select %p772, %s771, 63
      %p774 = scmp.lt.s32.totalorder %s19, 0
      %s775 = scalar_select %p774, %s19, 0
      %s776 = sadd.s32 %s775, %s773
      %s777 = smul.addr %s776, 8
      %s778 = scalar_lea.vmem %s2, %s777
      // Predicated region
      $region37: #{pallas_matmul.1} parent=27 // pred_check
        %p779 = pneg %p108
      $region38: #{pallas_matmul.1} parent=27 // pred_check_branch
        %781 = sbr.rel (%p779) target = $region40
      $region39: #{pallas_matmul.1} parent=27 // pred_region
        %s782 = smul.u32 32, %s18
      $region40: #{pallas_matmul.1} parent=27 // pred_fallthru
        _
    $region28: #{pallas_matmul.1} parent=5 // pred_fallthru
      _
    %p783 = scmp.le.s32.totalorder 2, %s8
    // Predicated region
    $region41: #{pallas_matmul.1} parent=5 // pred_check
      %p784 = pneg %p783
    $region42: #{pallas_matmul.1} parent=5 // pred_check_branch
      %786 = sbr.rel (%p784) target = $region44
    $region43: #{pallas_matmul.1} parent=5 // pred_region
      %s787 = ssub.s32 %s8, 2
      // Predicated region
      $region45: #{pallas_matmul.1} parent=43 // pred_check
        %p788 = pneg %p114
      $region46: #{pallas_matmul.1} parent=43 // pred_check_branch
        %790 = sbr.rel (%p788) target = $region48
      $region47: #{pallas_matmul.1} parent=43 // pred_region
        %s791 = smul.u32 32, %s21
        %p792 = scmp.lt.s32.totalorder %s791, 63
        %s793 = scalar_select %p792, %s791, 63
        %p794 = scmp.lt.s32.totalorder %s22, 0
        %s795 = scalar_select %p794, %s22, 0
        %s796 = sadd.s32 %s795, %s793
        %s797 = smul.addr %s796, 8
        %s798 = scalar_lea.vmem %s2, %s797
      $region48: #{pallas_matmul.1} parent=43 // pred_fallthru
        _
    $region44: #{pallas_matmul.1} parent=5 // pred_fallthru
      _
  $region6: #{pallas_matmul.1} parent=0 // loop_footer
    %s12 = sadd.s32 1, %s8
  $region7: #{pallas_matmul.1} parent=0 // loop_footer_branch
    %7 = sbr.rel target = $region3
  $region8: #{pallas_matmul.1} parent=0 // loop_exit
    _

</llo_original>
